<compile_context>
chip_gen: v6e
topology: v6e:2x2x1
jax: 0.10.0
libtpu: 0.0.40
codegen_flags: <defaults>
</compile_context>

<pallas_src>
import functools

import jax
import jax.numpy as jnp
from jax.experimental import pallas as pl
from jax.experimental.pallas import tpu as pltpu

_LANE = 128


def _round_up(x, m):
    return (x + m - 1) // m * m


def _vmem_capacity_bytes():
    """Physical VMEM per core; falls back to the smallest generation (v7x)."""
    try:
        return int(pltpu.get_tpu_info().vmem_capacity_bytes)
    except Exception:
        return 64 * 1024 * 1024


def _pick_tb(batch, per_batch_bytes, budget):
    """Largest batch tile whose double-buffered in+out slabs fit `budget`.
    Prefers >= 4 grid steps (2 per v7x TensorCore, keeps DMA/compute
    overlapped), then >= 2, otherwise the largest tile that fits.
    Returns None if even one batch row does not fit (two-pass path)."""
    max_tb = budget // max(1, 4 * per_batch_bytes)   # in + out, double-buffered
    if max_tb < 1:
        return None
    cap_tb = min(batch, max_tb)
    for target in (4, 2):
        if batch < target:
            continue
        for cand in (pl.cdiv(batch, target), batch // target):
            cand = min(cap_tb, max(1, cand))
            if pl.cdiv(batch, cand) >= target:
                return cand
    return cap_tb


def _pick_thw(hw, row_bytes_per_lane, n_buffers, budget):
    """Largest lane tile (multiple of 128, capped at round_up(hw, 128)) whose
    n_buffers copies fit `budget`."""
    max_units = _round_up(hw, _LANE) // _LANE
    fit_units = budget // max(1, n_buffers * row_bytes_per_lane * _LANE)
    return _LANE * max(1, min(max_units, fit_units))


def _x_block_spec(block_shape, index_map, buffer_depth):
    """BlockSpec for the streamed x input; optionally multi-buffered."""
    if buffer_depth and buffer_depth != 2:
        try:
            return pl.BlockSpec(block_shape, index_map,
                                pipeline_mode=pl.Buffered(buffer_depth))
        except (TypeError, AttributeError):
            pass  # older API: fall back to the default double buffering
    return pl.BlockSpec(block_shape, index_map)


# ---------------------------------------------------------------------------
# Kernels
# ---------------------------------------------------------------------------

def _se_fused_kernel(x_ref, w1t_ref, w2t_ref, o_ref):
    """Single pass: squeeze + excite + scale for a (TB, C, HW) batch tile."""
    x = x_ref[...]                                              # native dtype
    # Squeeze: f32 pooled SUM over spatial lanes (1/HW is folded into w1t).
    # Mosaic masks implicit lane padding when HW is not a multiple of 128.
    pooled = jnp.sum(x, axis=-1, dtype=jnp.float32)             # (TB, C)
    # Excitation: Linear -> ReLU -> Linear -> Sigmoid (all bias-free).
    h = jnp.maximum(
        jnp.dot(pooled, w1t_ref[...], preferred_element_type=jnp.float32), 0.0)
    logits = jnp.dot(h, w2t_ref[...], preferred_element_type=jnp.float32)
    # Exact reciprocal: the gate is only (TB, C) elements, so precision is free
    # here and the kernel stays HBM-bound regardless.
    y = pl.reciprocal(1.0 + jnp.exp(-logits))                   # sigmoid
    # Scale: stay in the native dtype (no full-tile f32 materialization).
    o_ref[...] = x * y.astype(o_ref.dtype)[:, :, None]


def _se_pool_excite_kernel(x_ref, w1t_ref, w2t_ref, y_ref, acc_ref, *, thw, hw):
    """Two-pass path, pass 1: pooled-sum accumulator over HW tiles, excitation
    on the final HW step.  Grid = (B, cdiv(HW, THW)); HW axis is 'arbitrary'."""
    hw_i = pl.program_id(1)

    @pl.when(hw_i == 0)
    def _init():
        acc_ref[...] = jnp.zeros_like(acc_ref)

    x = x_ref[...]                                              # (1, C, THW)
    if hw % thw != 0:
        # Ragged tail block: lanes past HW hold unspecified data -> mask to 0
        # before the pooled reduction (padding never biases the mean).
        col = jax.lax.broadcasted_iota(jnp.int32, x.shape, 2)
        x = jnp.where(hw_i * thw + col < hw, x, jnp.zeros_like(x))
    acc_ref[...] += jnp.sum(x, axis=-1, dtype=jnp.float32)      # (1, C)

    @pl.when(hw_i == pl.num_programs(1) - 1)
    def _finalize():
        pooled = acc_ref[...]                                   # (1, C); 1/HW in w1t
        h = jnp.maximum(
            jnp.dot(pooled, w1t_ref[...], preferred_element_type=jnp.float32), 0.0)
        logits = jnp.dot(h, w2t_ref[...], preferred_element_type=jnp.float32)
        y_ref[...] = pl.reciprocal(1.0 + jnp.exp(-logits))[:, :, None]


def _se_scale_kernel(y_ref, x_ref, o_ref):
    """Two-pass path, pass 2: lane-dense broadcast scale (no extra VPU work)."""
    o_ref[...] = x_ref[...] * y_ref[...].astype(o_ref.dtype)


# ---------------------------------------------------------------------------
# Wrapper
# ---------------------------------------------------------------------------

def se_layer(x, w1, w2, *, force_two_pass=False, buffer_depth=None):
    """SELayer forward.

    x:  (B, C, H, W)
    w1: (C // r, C)  -- torch nn.Linear(channel, channel // r, bias=False).weight
    w2: (C, C // r)  -- torch nn.Linear(channel // r, channel, bias=False).weight
    """
    B, C, H, W = x.shape
    HW = H * W
    itemsize = jnp.dtype(x.dtype).itemsize
    hidden = w1.shape[0]

    x_flat = x.reshape(B, C, HW)                     # free reshape; no padding

    inv_hw = 1.0 / float(HW)
    w1t = (w1.T * inv_hw).astype(jnp.float32)        # (C, C//r); 1/HW folded in
    w2t = w2.T.astype(jnp.float32)                   # (C//r, C)
    weight_bytes = int(w1t.size + w2t.size) * 4

    vmem_cap = _vmem_capacity_bytes()                # 128 MiB v5e/v6e, 64 MiB v7x
    vmem_limit = int(vmem_cap * 3 // 4)              # scoped-VMEM limit we request
    # Pipeline-buffer budget: derived from the limit we actually request (minus
    # weights and a 20% compiler-scratch margin), not vmem_cap/4.
    budget = max(int(vmem_limit * 0.8) - weight_bytes, 2 * 1024 * 1024)

    per_batch_bytes = C * HW * itemsize
    tb = None if force_two_pass else _pick_tb(B, per_batch_bytes, budget)

    io_bytes = 2 * B * C * HW * itemsize + weight_bytes
    mlp_flops = 4 * B * C * hidden
    cost = pl.CostEstimate(flops=2 * B * C * HW + mlp_flops,
                           transcendentals=B * C,
                           bytes_accessed=io_bytes)

    if tb is not None:
        # ---- Single pass: read x once; pool + excite + scale per batch tile.
        grid_b = pl.cdiv(B, tb)
        if buffer_depth is None:
            # Triple-buffer tiny slabs on 128 MiB-VMEM parts (v5e/v6e) when
            # there are enough steps; v7x keeps the default depth of 2.
            small_slab = tb * per_batch_bytes <= 8 * 1024 * 1024
            buffer_depth = 3 if (vmem_cap >= 96 * 1024 * 1024 and grid_b >= 4
                                 and small_slab) else 2
        out_flat = pl.pallas_call(
            _se_fused_kernel,
            out_shape=jax.ShapeDtypeStruct((B, C, HW), x.dtype),
            grid_spec=pltpu.PrefetchScalarGridSpec(
                num_scalar_prefetch=0,
                grid=(grid_b,),
                in_specs=[
                    _x_block_spec((tb, C, HW), lambda b: (b, 0, 0), buffer_depth),
                    pl.BlockSpec(w1t.shape, lambda b: (0, 0)),
                    pl.BlockSpec(w2t.shape, lambda b: (0, 0)),
                ],
                out_specs=pl.BlockSpec((tb, C, HW), lambda b: (b, 0, 0)),
            ),
            compiler_params=pltpu.CompilerParams(
                dimension_semantics=("parallel",),
                vmem_limit_bytes=vmem_limit),
            cost_estimate=cost,
        )(x_flat, w1t, w2t)
    else:
        # ---- Two-pass fallback for very large C*HW slabs.
        # Pass 1: pooled sum + excitation, HW tiled as the reduction axis.
        thw1 = _pick_thw(HW, C * itemsize, 2, budget)
        y = pl.pallas_call(
            functools.partial(_se_pool_excite_kernel, thw=thw1, hw=HW),
            out_shape=jax.ShapeDtypeStruct((B, C, 1), jnp.float32),
            grid_spec=pltpu.PrefetchScalarGridSpec(
                num_scalar_prefetch=0,
                grid=(B, pl.cdiv(HW, thw1)),
                in_specs=[
                    pl.BlockSpec((1, C, thw1), lambda b, h: (b, 0, h)),
                    pl.BlockSpec(w1t.shape, lambda b, h: (0, 0)),
                    pl.BlockSpec(w2t.shape, lambda b, h: (0, 0)),
                ],
                out_specs=pl.BlockSpec((1, C, 1), lambda b, h: (b, 0, 0)),
                scratch_shapes=[pltpu.VMEM((1, C), jnp.float32)],
            ),
            compiler_params=pltpu.CompilerParams(
                dimension_semantics=("parallel", "arbitrary"),
                vmem_limit_bytes=vmem_limit),
            cost_estimate=pl.CostEstimate(
                flops=B * C * HW + mlp_flops, transcendentals=B * C,
                bytes_accessed=B * C * HW * itemsize + weight_bytes),
        )(x_flat, w1t, w2t)

        # Pass 2: pure lane-dense scale, tiled over batch and HW.
        thw2 = _pick_thw(HW, C * itemsize, 4, budget)
        if thw2 >= HW:
            thw2 = HW                     # full-dim block: legal even if HW % 128 != 0
        tb2 = min(B, max(1, budget // max(1, 4 * C * thw2 * itemsize)))
        out_flat = pl.pallas_call(
            _se_scale_kernel,
            out_shape=jax.ShapeDtypeStruct((B, C, HW), x.dtype),
            grid_spec=pltpu.PrefetchScalarGridSpec(
                num_scalar_prefetch=0,
                grid=(pl.cdiv(B, tb2), pl.cdiv(HW, thw2)),
                in_specs=[
                    pl.BlockSpec((tb2, C, 1), lambda b, h: (b, 0, 0)),
                    pl.BlockSpec((tb2, C, thw2), lambda b, h: (b, 0, h)),
                ],
                out_specs=pl.BlockSpec((tb2, C, thw2), lambda b, h: (b, 0, h)),
            ),
            compiler_params=pltpu.CompilerParams(
                dimension_semantics=("parallel", "parallel"),
                vmem_limit_bytes=vmem_limit),
            cost_estimate=pl.CostEstimate(
                flops=B * C * HW, transcendentals=0,
                bytes_accessed=2 * B * C * HW * itemsize),
        )(y, x_flat)

    return out_flat.reshape(B, C, H, W)


def se_layer_ref(x, w1, w2):
    pooled = jnp.mean(x, axis=(2, 3))                 # (B, C)
    h = jnp.maximum(pooled @ w1.T, 0.0)               # (B, C//r)
    y = jax.nn.sigmoid(h @ w2.T)                      # (B, C)
    return x * y[:, :, None, None]


if __name__ == "__main__":
    # SELayer(channel=32, reduction=16) -> hidden dim = 2
    B, C, H, W = 2, 32, 16, 16
    reduction = 16
    hidden = C // reduction

    key = jax.random.PRNGKey(0)
    kx, k1, k2, kb = jax.random.split(key, 4)
    x = jax.random.normal(kx, (B, C, H, W), dtype=jnp.float32)
    # torch nn.Linear(channel, channel//reduction, bias=False): weight (hidden, C)
    w1 = jax.random.normal(k1, (hidden, C), dtype=jnp.float32) * 0.1
    # torch nn.Linear(channel//reduction, channel, bias=False): weight (C, hidden)
    w2 = jax.random.normal(k2, (C, hidden), dtype=jnp.float32) * 0.1

    ref = se_layer_ref(x, w1, w2)

    # Default (single-pass, batch-tiled) path.
    out = jax.block_until_ready(se_layer(x, w1, w2))
    assert out.shape == (B, C, H, W)
    assert jnp.allclose(out, ref, atol=1e-5, rtol=1e-5)

    # Exercise the large-feature-map (two-pass) path at the same small shape.
    out2 = jax.block_until_ready(se_layer(x, w1, w2, force_two_pass=True))
    assert jnp.allclose(out2, ref, atol=1e-5, rtol=1e-5)

    # Non-multiple-of-128 spatial size -> unpadded lane tail (HW = 49).
    x_odd = jax.random.normal(kx, (B, C, 7, 7), dtype=jnp.float32)
    ref_odd = se_layer_ref(x_odd, w1, w2)
    out_odd = jax.block_until_ready(se_layer(x_odd, w1, w2))
    assert jnp.allclose(out_odd, ref_odd, atol=1e-5, rtol=1e-5)

    # Two-pass path with a ragged HW tail (exercises the in-kernel mask).
    out_odd2 = jax.block_until_ready(se_layer(x_odd, w1, w2, force_two_pass=True))
    assert jnp.allclose(out_odd2, ref_odd, atol=1e-5, rtol=1e-5)

    # Larger batch -> multi-step grid (>= 4 steps; Buffered(3) on 128 MiB parts).
    xb = jax.random.normal(kb, (8, C, H, W), dtype=jnp.float32)
    ref_b = se_layer_ref(xb, w1, w2)
    out_b = jax.block_until_ready(se_layer(xb, w1, w2))
    assert jnp.allclose(out_b, ref_b, atol=1e-5, rtol=1e-5)

    print("KERNEL_OK")
</pallas_src>

<mosaic_0001>
module attributes {stable_mosaic.version = 11 : i64} {
  func.func @_se_fused_kernel(%arg0: i32, %arg1: memref<1x32x256xf32, #tpu.memory_space<vmem>>, %arg2: memref<32x2xf32, #tpu.memory_space<vmem>>, %arg3: memref<2x32xf32, #tpu.memory_space<vmem>>, %arg4: memref<1x32x256xf32, #tpu.memory_space<vmem>>) attributes {dimension_semantics = [#tpu.dimension_semantics<parallel>], iteration_bounds = array<i64: 2>, scalar_prefetch = 0 : i64, scratch_operands = 0 : i64, tpu.core_type = #tpu.core_type<tc>, window_params = [{transform_indices = @transform_0, window_bounds = array<i64: 1, 32, 256>}, {pipeline_mode = #tpu.pipeline_mode<synchronous>, transform_indices = @transform_1, window_bounds = array<i64: 32, 2>}, {pipeline_mode = #tpu.pipeline_mode<synchronous>, transform_indices = @transform_2, window_bounds = array<i64: 2, 32>}, {transform_indices = @transform_3, window_bounds = array<i64: 1, 32, 256>}]} {
    %c0 = arith.constant 0 : index
    %c0_0 = arith.constant 0 : index
    %c0_1 = arith.constant 0 : index
    %0 = vector.load %arg1[%c0, %c0_0, %c0_1] : memref<1x32x256xf32, #tpu.memory_space<vmem>>, vector<1x32x256xf32>
    %cst = arith.constant dense<0.000000e+00> : vector<1x32xf32>
    %1 = vector.multi_reduction <add>, %0, %cst [2] : vector<1x32x256xf32> to vector<1x32xf32>
    %c0_2 = arith.constant 0 : index
    %c0_3 = arith.constant 0 : index
    %2 = vector.load %arg2[%c0_2, %c0_3] : memref<32x2xf32, #tpu.memory_space<vmem>>, vector<32x2xf32>
    %cst_4 = arith.constant dense<0.000000e+00> : vector<1x2xf32>
    %3 = tpu.matmul %1, %2, %cst_4 {dimension_numbers = #tpu.dot_dimension_numbers<[1], [0], [0], [1], [0, 0, 1, 1], [], []>} : vector<1x32xf32>, vector<32x2xf32>, vector<1x2xf32> -> vector<1x2xf32>
    %cst_5 = arith.constant 0.000000e+00 : f32
    %4 = vector.broadcast %cst_5 : f32 to vector<1x2xf32>
    %5 = arith.maximumf %3, %4 : vector<1x2xf32>
    %c0_6 = arith.constant 0 : index
    %c0_7 = arith.constant 0 : index
    %6 = vector.load %arg3[%c0_6, %c0_7] : memref<2x32xf32, #tpu.memory_space<vmem>>, vector<2x32xf32>
    %cst_8 = arith.constant dense<0.000000e+00> : vector<1x32xf32>
    %7 = tpu.matmul %5, %6, %cst_8 {dimension_numbers = #tpu.dot_dimension_numbers<[1], [0], [0], [1], [0, 0, 1, 1], [], []>} : vector<1x2xf32>, vector<2x32xf32>, vector<1x32xf32> -> vector<1x32xf32>
    %cst_9 = arith.constant 0.000000e+00 : f32
    %8 = vector.broadcast %cst_9 : f32 to vector<1x32xf32>
    %9 = arith.subf %8, %7 : vector<1x32xf32>
    %10 = math.exp %9 : vector<1x32xf32>
    %cst_10 = arith.constant 1.000000e+00 : f32
    %11 = vector.broadcast %cst_10 : f32 to vector<1x32xf32>
    %12 = arith.addf %11, %10 : vector<1x32xf32>
    %13 = tpu.reciprocal %12 : vector<1x32xf32> -> vector<1x32xf32>
    %14 = vector.shape_cast %13 : vector<1x32xf32> to vector<1x32x1xf32>
    %15 = vector.broadcast %14 : vector<1x32x1xf32> to vector<1x32x256xf32>
    %16 = arith.mulf %0, %15 : vector<1x32x256xf32>
    %c0_11 = arith.constant 0 : index
    %c0_12 = arith.constant 0 : index
    %c0_13 = arith.constant 0 : index
    %17 = vector.load %arg4[%c0_11, %c0_12, %c0_13] : memref<1x32x256xf32, #tpu.memory_space<vmem>>, vector<1x32x256xf32>
    tpu.vector_store %arg4[%c0_11, %c0_12, %c0_13], %16 {strides = array<i32>} : memref<1x32x256xf32, #tpu.memory_space<vmem>>, vector<1x32x256xf32>,
    return
  }
  func.func @transform_0(%arg0: i32) -> (i32, i32, i32) {
    %c0_i32 = arith.constant 0 : i32
    %c0_i32_0 = arith.constant 0 : i32
    %c0_i32_1 = arith.constant 0 : i32
    return %arg0, %c0_i32, %c0_i32_0 : i32, i32, i32
  }
  func.func @transform_1(%arg0: i32) -> (i32, i32) {
    %c0_i32 = arith.constant 0 : i32
    %c0_i32_0 = arith.constant 0 : i32
    %c0_i32_1 = arith.constant 0 : i32
    return %c0_i32, %c0_i32_0 : i32, i32
  }
  func.func @transform_2(%arg0: i32) -> (i32, i32) {
    %c0_i32 = arith.constant 0 : i32
    %c0_i32_0 = arith.constant 0 : i32
    %c0_i32_1 = arith.constant 0 : i32
    return %c0_i32, %c0_i32_0 : i32, i32
  }
  func.func @transform_3(%arg0: i32) -> (i32, i32, i32) {
    %c0_i32 = arith.constant 0 : i32
    %c0_i32_0 = arith.constant 0 : i32
    %c0_i32_1 = arith.constant 0 : i32
    return %arg0, %c0_i32, %c0_i32_0 : i32, i32, i32
  }
}

</mosaic_0001>

<llo_original>
// kernel: tpu_custom_call.1
$region0: #{tpu_custom_call.1}
  #allocation0 [shape = 'u32[]', space=smem, size = 0x4, offset = 0x4, fixed_abs, tag = 'smem constant byte address 0x4 - core index']
  #allocation1 [shape = 'u32[144,128]{1,0:T(1,128)}', space=vmem, size = 0x12000, scoped, tag = 'internal scratch']
  %s0 = inlined_call_operand.hbm [shape: f32[2,32,256], index: 0, kind: input, shape index: {}]
  %s1 = inlined_call_operand.vmem [shape: f32[32,2], index: 1, kind: input, shape index: {}]
  %s2 = inlined_call_operand.vmem [shape: f32[2,32], index: 2, kind: input, shape index: {}]
  %s3 = inlined_call_operand.hbm [shape: f32[2,32,256], index: 3, kind: output, shape index: {}]
  %s4 = sld [smem:[#allocation0]]
  $region49: #{tpu_custom_call.1} parent=0
    _
  %s6 = ssub.s32 1, %s4
  %s7 = scalar_select 0, %s6, %s4
  $region1: #{tpu_custom_call.1} parent=0
    #allocation2 [shape = 'u8[65536]{0}', space=vmem, size = 0x10000, scoped, tag = 'input window, operand 0']
    #allocation3 [shape = 's32[2]{0}', space=sflag, size = 0x8, scoped, tag = 'scoped memory for tpu_custom_call.1']
    #allocation4 [shape = 's32[2]{0}', space=sflag, size = 0x8, scoped, tag = 'scoped memory for tpu_custom_call.1']
    #allocation5 [shape = 'u8[65536]{0}', space=vmem, size = 0x10000, scoped, tag = 'output window, operand 0']
    %8 = vsyncpa [#allocation3], 0
    %s9 = scalar_lea.sflag [#allocation3], 1
    %10 = vsyncpa %s9, 0
    %11 = vsyncpa [#allocation4], 0
    %s12 = scalar_lea.sflag [#allocation4], 1
    %13 = vsyncpa %s12, 0
    loop: start=0, step=1, limit=4
    $region2: #{tpu_custom_call.1} parent=1 // loop_pre_header
      _
    $region3: #{tpu_custom_call.1} parent=1 // loop_header
      %s15 = sphi 0, %s19
      %p16 = scmp.ge.s32.totalorder %s15, 4
      %s25 = sphi 0, %s27
      %s28 = sphi 0, %s25
      %s29 = sphi 0, %s28
      %s45 = sphi 0, %s29
      %s49 = sphi 0, %s49
      %s51 = sphi 0, %s49
      %s52 = sphi 0, %s51
      %s66 = sphi 0, %s52
      %s70 = sphi 0, %s70
      %s72 = sphi 0, %s70
      %s73 = sphi 0, %s72
      %s87 = sphi 0, %s73
      %s93 = sphi 0, %s95
      %s96 = sphi 0, %s93
      %s97 = sphi 0, %s96
      %s113 = sphi 0, %s97
    $region4: #{tpu_custom_call.1} parent=1 // loop_header_branch
      %18 = sbr.rel (%p16) target = $region8
    $region5: #{tpu_custom_call.1} parent=1 // loop_body
      %s20 = ssub.s32 %s15, 1
      %s21 = ssub.s32 %s15, 2
      %s22 = sadd.s32 %s15, 1
      %s23 = ssub.s32 %s15, %s22
      %p24 = scmp.eq.s32.totalorder %s23, 0
      %s26 = sadd.s32 %s25, 1
      %s27 = scalar_select %p24, %s25, %s26
      %p30 = pneg %p24
      %p31 = scmp.eq.s32.totalorder %s15, 1
      %p32 = por %p30, %p31
      %p33 = scmp.ne.s32.totalorder %s25, %s28
      %p34 = scmp.eq.s32.totalorder %s15, 0
      %p35 = por %p33, %p34
      %p36 = scmp.ne.s32.totalorder %s25, %s28
      %p37 = scmp.eq.s32.totalorder %s20, 1
      %p38 = por %p36, %p37
      %p39 = scmp.ne.s32.totalorder %s28, %s29
      %p40 = scmp.eq.s32.totalorder %s20, 0
      %p41 = por %p39, %p40
      %p42 = scmp.ne.s32.totalorder %s28, %s29
      %p43 = scmp.eq.s32.totalorder %s21, 1
      %p44 = por %p42, %p43
      %p46 = scmp.ne.s32.totalorder %s29, %s45
      %p47 = scmp.eq.s32.totalorder %s21, 0
      %p48 = por %p46, %p47
      %s50 = sadd.s32 %s49, 1
      %p53 = scmp.eq.s32.totalorder %s15, 1
      %p54 = scmp.ne.s32.totalorder %s49, %s51
      %p55 = scmp.eq.s32.totalorder %s15, 0
      %p56 = por %p54, %p55
      %p57 = scmp.ne.s32.totalorder %s49, %s51
      %p58 = scmp.eq.s32.totalorder %s20, 1
      %p59 = por %p57, %p58
      %p60 = scmp.ne.s32.totalorder %s51, %s52
      %p61 = scmp.eq.s32.totalorder %s20, 0
      %p62 = por %p60, %p61
      %p63 = scmp.ne.s32.totalorder %s51, %s52
      %p64 = scmp.eq.s32.totalorder %s21, 1
      %p65 = por %p63, %p64
      %p67 = scmp.ne.s32.totalorder %s52, %s66
      %p68 = scmp.eq.s32.totalorder %s21, 0
      %p69 = por %p67, %p68
      %s71 = sadd.s32 %s70, 1
      %p74 = scmp.eq.s32.totalorder %s15, 1
      %p75 = scmp.ne.s32.totalorder %s70, %s72
      %p76 = scmp.eq.s32.totalorder %s15, 0
      %p77 = por %p75, %p76
      %p78 = scmp.ne.s32.totalorder %s70, %s72
      %p79 = scmp.eq.s32.totalorder %s20, 1
      %p80 = por %p78, %p79
      %p81 = scmp.ne.s32.totalorder %s72, %s73
      %p82 = scmp.eq.s32.totalorder %s20, 0
      %p83 = por %p81, %p82
      %p84 = scmp.ne.s32.totalorder %s72, %s73
      %p85 = scmp.eq.s32.totalorder %s21, 1
      %p86 = por %p84, %p85
      %p88 = scmp.ne.s32.totalorder %s73, %s87
      %p89 = scmp.eq.s32.totalorder %s21, 0
      %p90 = por %p88, %p89
      %s91 = ssub.s32 %s15, %s22
      %p92 = scmp.eq.s32.totalorder %s91, 0
      %s94 = sadd.s32 %s93, 1
      %s95 = scalar_select %p92, %s93, %s94
      %p98 = pneg %p92
      %p99 = scmp.eq.s32.totalorder %s15, 1
      %p100 = por %p98, %p99
      %p101 = scmp.ne.s32.totalorder %s93, %s96
      %p102 = scmp.eq.s32.totalorder %s15, 0
      %p103 = por %p101, %p102
      %p104 = scmp.ne.s32.totalorder %s93, %s96
      %p105 = scmp.eq.s32.totalorder %s20, 1
      %p106 = por %p104, %p105
      %p107 = scmp.ne.s32.totalorder %s96, %s97
      %p108 = scmp.eq.s32.totalorder %s20, 0
      %p109 = por %p107, %p108
      %p110 = scmp.ne.s32.totalorder %s96, %s97
      %p111 = scmp.eq.s32.totalorder %s21, 1
      %p112 = por %p110, %p111
      %p114 = scmp.ne.s32.totalorder %s97, %s113
      %p115 = scmp.eq.s32.totalorder %s21, 0
      %p116 = por %p114, %p115
      %p117 = scmp.le.s32.totalorder 1, %s15
      %p118 = scmp.lt.s32.totalorder %s15, 3
      %p119 = pnand %p117, %p118
      %p120 = pneg %p119
      // Predicated region
      $region9: #{tpu_custom_call.1} parent=5 // pred_check
        _
      $region10: #{tpu_custom_call.1} parent=5 // pred_check_branch
        %122 = sbr.rel (%p119) target = $region12
      $region11: #{tpu_custom_call.1} parent=5 // pred_region
        %s123 = ssub.s32 %s15, 1
        // Predicated region
        $region13: #{tpu_custom_call.1} parent=11 // pred_check
          %p124 = pneg %p62
        $region14: #{tpu_custom_call.1} parent=11 // pred_check_branch
          %126 = sbr.rel (%p124) target = $region16
        $region15: #{tpu_custom_call.1} parent=11 // pred_region
          _
        $region16: #{tpu_custom_call.1} parent=11 // pred_fallthru
          _
        // Predicated region
        $region17: #{tpu_custom_call.1} parent=11 // pred_check
          %p127 = pneg %p83
        $region18: #{tpu_custom_call.1} parent=11 // pred_check_branch
          %129 = sbr.rel (%p127) target = $region20
        $region19: #{tpu_custom_call.1} parent=11 // pred_region
          _
        $region20: #{tpu_custom_call.1} parent=11 // pred_fallthru
          _
      $region12: #{tpu_custom_call.1} parent=5 // pred_fallthru
        _
      %p130 = scmp.lt.s32.totalorder %s15, 2
      // Predicated region
      $region21: #{tpu_custom_call.1} parent=5 // pred_check
        %p131 = pneg %p130
      $region22: #{tpu_custom_call.1} parent=5 // pred_check_branch
        %133 = sbr.rel (%p131) target = $region24
      $region23: #{tpu_custom_call.1} parent=5 // pred_region
        // Predicated region
        $region25: #{tpu_custom_call.1} parent=23 // pred_check
          %p134 = pneg %p35
        $region26: #{tpu_custom_call.1} parent=23 // pred_check_branch
          %136 = sbr.rel (%p134) target = $region28
        $region27: #{tpu_custom_call.1} parent=23 // pred_region
          %s137 = sand.u32 %s25, 1
          %s138 = scalar_lea.sflag [#allocation3], %s137
          %s139 = sand.u32 %s25, 1
          %s140 = smul.addr %s139, 64
          %s141 = scalar_lea.vmem [#allocation2], %s140
          %s143 = ssub.s32 1024, 1024
          %144 = vsyncadd %s138, %s143
          %s145 = smul.addr %s15, 8
          %s146 = smul.addr %s145, 128
          %s147 = scalar_lea.hbm %s0, %s146
          %s148 = sshll.u32 %s141, 4
          %s149 = int_to_ptr.vmem [resolvable:$true] %s148
          %154 = dma.hbm_to_vmem [thread:$0]  %s147, 1024, %s149, %s138, 256, 256, 16
        $region28: #{tpu_custom_call.1} parent=23 // pred_fallthru
          _
      $region24: #{tpu_custom_call.1} parent=5 // pred_fallthru
        _
      %p155 = scmp.le.s32.totalorder 1, %s15
      %p156 = scmp.lt.s32.totalorder %s15, 3
      %p157 = pnand %p155, %p156
      %p158 = pneg %p157
      // Predicated region
      $region29: #{tpu_custom_call.1} parent=5 // pred_check
        _
      $region30: #{tpu_custom_call.1} parent=5 // pred_check_branch
        %160 = sbr.rel (%p157) target = $region32
      $region31: #{tpu_custom_call.1} parent=5 // pred_region
        %s161 = ssub.s32 %s15, 1
        %s162 = sand.u32 %s28, 1
        %s163 = scalar_lea.sflag [#allocation3], %s162
        %s164 = sand.u32 %s28, 1
        %s165 = smul.addr %s164, 64
        %s166 = scalar_lea.vmem [#allocation2], %s165
        // Predicated region
        $region33: #{tpu_custom_call.1} parent=31 // pred_check
          %p167 = pneg %p41
        $region34: #{tpu_custom_call.1} parent=31 // pred_check_branch
          %169 = sbr.rel (%p167) target = $region36
        $region35: #{tpu_custom_call.1} parent=31 // pred_region
          %170 = dma.done %s163, 1024
        $region36: #{tpu_custom_call.1} parent=31 // pred_fallthru
          _
        %s171 = sand.u32 %s28, 1
        %s172 = scalar_lea.sflag [#allocation3], %s171
        %s173 = sand.u32 %s28, 1
        %s174 = smul.addr %s173, 64
        %s175 = scalar_lea.vmem [#allocation2], %s174
        %p176 = pneg %p41
        %p177 = pneg %p38
        %p178 = pneg %p62
        %p179 = pneg %p59
        %p180 = pneg %p83
        %p181 = pneg %p80
        %p182 = pneg %p109
        %p183 = pneg %p106
        %s184 = sand.u32 %s96, 1
        %s185 = scalar_lea.sflag [#allocation4], %s184
        %s186 = sand.u32 %s96, 1
        %s187 = smul.addr %s186, 64
        %s188 = scalar_lea.vmem [#allocation5], %s187
        %v189 = vld [vmem:[%s166] sm:$0xff]
        %v190 = vld [vmem:[%s166 + $0x8] sm:$0xff]
        %v191 = vld [vmem:[%s166 + $0x10] sm:$0xff]
        %v192 = vld [vmem:[%s166 + $0x18] sm:$0xff]
        %v193 = vld [vmem:[%s166 + $0x20] sm:$0xff]
        %v194 = vld [vmem:[%s166 + $0x28] sm:$0xff]
        %v195 = vld [vmem:[%s166 + $0x30] sm:$0xff]
        %v196 = vld [vmem:[%s166 + $0x38] sm:$0xff]
        %v197 = vadd.f32 %v189, %v190
        %198 = vadd.xlane.f32.xlu0 %v197
        %v199 = vpop.xlane.xlu0 %198
        %v200 = vadd.f32 %v191, %v192
        %201 = vadd.xlane.f32.xlu0 %v200
        %v202 = vpop.xlane.xlu0 %201
        %v203 = vadd.f32 %v193, %v194
        %204 = vadd.xlane.f32.xlu0 %v203
        %v205 = vpop.xlane.xlu0 %204
        %v206 = vadd.f32 %v195, %v196
        %207 = vadd.xlane.f32.xlu0 %v206
        %v208 = vpop.xlane.xlu0 %207
        %v209 = vld [vmem:[%s1] sm:$0xff]
        %v210 = vld [vmem:[%s1 + $0x8] sm:$0xff]
        %v211 = vld [vmem:[%s1 + $0x10] sm:$0xff]
        %v212 = vld [vmem:[%s1 + $0x18] sm:$0xff]
        %v217 = vlaneseq
        %v218 = vand.u32 %v217, 127
        %v219 = vlaneseq
        %v220 = vshrl.u32 %v219, 7
        %v221 = vsub.s32 %v218, %v220
        %v222 = vrot.slane %v199, %v221
        %v223 = vadd.s32 %v218, 4294967288
        %v224 = vlaneseq
        %v225 = vshrl.u32 %v224, 7
        %v226 = vsub.s32 %v223, %v225
        %v227 = vrot.slane %v202, %v226
        %vm228 = vcmask 130112
        %v229 = vsel %vm228, %v227, %v222
        %v230 = vadd.s32 %v218, 4294967280
        %v231 = vlaneseq
        %v232 = vshrl.u32 %v231, 7
        %v233 = vsub.s32 %v230, %v232
        %v234 = vrot.slane %v205, %v233
        %vm235 = vcmask 195712
        %v236 = vsel %vm235, %v234, %v229
        %v237 = vadd.s32 %v218, 4294967272
        %v238 = vlaneseq
        %v239 = vshrl.u32 %v238, 7
        %v240 = vsub.s32 %v237, %v239
        %v241 = vrot.slane %v208, %v240
        %vm242 = vcmask 261312
        %v243 = vsel %vm242, %v241, %v236
        %vm244 = vcmask 261120
        %v245 = vsel %vm244, %v243, 0
        %247 = vmatprep.subr.mxu0 0.0
        %248 = vmatpush1.msra.mxu0 0.0
        %249 = vmatprep.subr.mxu0 0.0
        %250 = vmatpush1.msra.mxu0 0.0
        %251 = vmatprep.subr.mxu0 0.0
        %252 = vmatpush1.msra.mxu0 0.0
        %253 = vmatprep.subr.mxu0 0.0
        %254 = vmatpush1.msra.mxu0 0.0
        %255 = vmatprep.subr.mxu0 0.0
        %256 = vmatpush1.msra.mxu0 0.0
        %257 = vmatprep.subr.mxu0 0.0
        %258 = vmatpush1.msra.mxu0 0.0
        %259 = vmatprep.subr.mxu0 0.0
        %260 = vmatpush1.msra.mxu0 0.0
        %261 = vmatprep.subr.mxu0 0.0
        %262 = vmatpush1.msra.mxu0 0.0
        %263 = vmatprep.subr.mxu0 0.0
        %264 = vmatpush1.msra.mxu0 0.0
        %265 = vmatprep.subr.mxu0 0.0
        %266 = vmatpush1.msra.mxu0 0.0
        %267 = vmatprep.subr.mxu0 0.0
        %268 = vmatpush1.msra.mxu0 0.0
        %269 = vmatprep.subr.mxu0 0.0
        %270 = vmatpush1.msra.mxu0 0.0
        %271 = vmatprep.subr.mxu0 0.0
        %272 = vmatpush1.msra.mxu0 %v212
        %273 = vmatprep.subr.mxu0 0.0
        %274 = vmatpush1.msra.mxu0 %v211
        %275 = vmatprep.subr.mxu0 0.0
        %276 = vmatpush1.msra.mxu0 %v210
        %277 = vmatprep.subr.mxu0 0.0
        %278 = vmatpush1.msra.mxu0 %v209
        %279 = vmatprep.subr.mxu0 0.0
        %280 = vmatpush2.msra.mxu0 0.0
        %281 = vmatprep.subr.mxu0 0.0
        %282 = vmatpush2.msra.mxu0 0.0
        %283 = vmatprep.subr.mxu0 0.0
        %284 = vmatpush2.msra.mxu0 0.0
        %285 = vmatprep.subr.mxu0 0.0
        %286 = vmatpush2.msra.mxu0 0.0
        %287 = vmatprep.subr.mxu0 0.0
        %288 = vmatpush2.msra.mxu0 0.0
        %289 = vmatprep.subr.mxu0 0.0
        %290 = vmatpush2.msra.mxu0 0.0
        %291 = vmatprep.subr.mxu0 0.0
        %292 = vmatpush2.msra.mxu0 0.0
        %293 = vmatprep.subr.mxu0 0.0
        %294 = vmatpush2.msra.mxu0 0.0
        %295 = vmatprep.subr.mxu0 0.0
        %296 = vmatpush2.msra.mxu0 0.0
        %297 = vmatprep.subr.mxu0 0.0
        %298 = vmatpush2.msra.mxu0 0.0
        %299 = vmatprep.subr.mxu0 0.0
        %300 = vmatpush2.msra.mxu0 0.0
        %301 = vmatprep.subr.mxu0 0.0
        %302 = vmatpush2.msra.mxu0 0.0
        %303 = vmatprep.subr.mxu0 0.0
        %304 = vmatpush2.msra.mxu0 0.0
        %305 = vmatprep.subr.mxu0 0.0
        %306 = vmatpush2.msra.mxu0 0.0
        %307 = vmatprep.subr.mxu0 0.0
        %308 = vmatpush2.msra.mxu0 0.0
        %309 = vmatprep.subr.mxu0 0.0
        %310 = vmatpush2.msra.mxu0 0.0
        %311 = vmatprep.mubr.f32.mxu0 0.0
        %312 = vmatmul.mubr.f32.gmra.mxu0 %v245
        %v313 = vpop.f32.mrf.mxu0
        %v314 = vadd.f32 0.0, %v313
        %v315 = vpop.f32.mrf.mxu0
        %316 = vdwg.mxu0
        %v317 = vmax.f32 %v314, 0.0
        %v318 = vld [vmem:[%s2] sm:$0x3]
        %vm319 = vcmask 15360
        %v321 = vsel %vm319, %v317, 0
        %vm323 = vcmask 1041408
        %v325 = vsel %vm323, %v318, 0
        %327 = vmatprep.subr.mxu0 0.0
        %328 = vmatpush1.msra.mxu0 0.0
        %329 = vmatprep.subr.mxu0 0.0
        %330 = vmatpush1.msra.mxu0 0.0
        %331 = vmatprep.subr.mxu0 0.0
        %332 = vmatpush1.msra.mxu0 0.0
        %333 = vmatprep.subr.mxu0 0.0
        %334 = vmatpush1.msra.mxu0 0.0
        %335 = vmatprep.subr.mxu0 0.0
        %336 = vmatpush1.msra.mxu0 0.0
        %337 = vmatprep.subr.mxu0 0.0
        %338 = vmatpush1.msra.mxu0 0.0
        %339 = vmatprep.subr.mxu0 0.0
        %340 = vmatpush1.msra.mxu0 0.0
        %341 = vmatprep.subr.mxu0 0.0
        %342 = vmatpush1.msra.mxu0 0.0
        %343 = vmatprep.subr.mxu0 0.0
        %344 = vmatpush1.msra.mxu0 0.0
        %345 = vmatprep.subr.mxu0 0.0
        %346 = vmatpush1.msra.mxu0 0.0
        %347 = vmatprep.subr.mxu0 0.0
        %348 = vmatpush1.msra.mxu0 0.0
        %349 = vmatprep.subr.mxu0 0.0
        %350 = vmatpush1.msra.mxu0 0.0
        %351 = vmatprep.subr.mxu0 0.0
        %352 = vmatpush1.msra.mxu0 0.0
        %353 = vmatprep.subr.mxu0 0.0
        %354 = vmatpush1.msra.mxu0 0.0
        %355 = vmatprep.subr.mxu0 0.0
        %356 = vmatpush1.msra.mxu0 0.0
        %357 = vmatprep.subr.mxu0 0.0
        %358 = vmatpush1.msra.mxu0 %v325
        %359 = vmatprep.subr.mxu0 0.0
        %360 = vmatpush2.msra.mxu0 0.0
        %361 = vmatprep.subr.mxu0 0.0
        %362 = vmatpush2.msra.mxu0 0.0
        %363 = vmatprep.subr.mxu0 0.0
        %364 = vmatpush2.msra.mxu0 0.0
        %365 = vmatprep.subr.mxu0 0.0
        %366 = vmatpush2.msra.mxu0 0.0
        %367 = vmatprep.subr.mxu0 0.0
        %368 = vmatpush2.msra.mxu0 0.0
        %369 = vmatprep.subr.mxu0 0.0
        %370 = vmatpush2.msra.mxu0 0.0
        %371 = vmatprep.subr.mxu0 0.0
        %372 = vmatpush2.msra.mxu0 0.0
        %373 = vmatprep.subr.mxu0 0.0
        %374 = vmatpush2.msra.mxu0 0.0
        %375 = vmatprep.subr.mxu0 0.0
        %376 = vmatpush2.msra.mxu0 0.0
        %377 = vmatprep.subr.mxu0 0.0
        %378 = vmatpush2.msra.mxu0 0.0
        %379 = vmatprep.subr.mxu0 0.0
        %380 = vmatpush2.msra.mxu0 0.0
        %381 = vmatprep.subr.mxu0 0.0
        %382 = vmatpush2.msra.mxu0 0.0
        %383 = vmatprep.subr.mxu0 0.0
        %384 = vmatpush2.msra.mxu0 0.0
        %385 = vmatprep.subr.mxu0 0.0
        %386 = vmatpush2.msra.mxu0 0.0
        %387 = vmatprep.subr.mxu0 0.0
        %388 = vmatpush2.msra.mxu0 0.0
        %389 = vmatprep.subr.mxu0 0.0
        %390 = vmatpush2.msra.mxu0 0.0
        %391 = vmatprep.mubr.f32.mxu0 0.0
        %392 = vmatmul.mubr.f32.gmra.mxu0 %v321
        %v393 = vpop.f32.mrf.mxu0
        %v394 = vadd.f32 0.0, %v393
        %v395 = vpop.f32.mrf.mxu0
        %396 = vdwg.mxu0
        %v397 = vsub.f32 0.0, %v394
        %v398 = vmul.f32 %v397, 1.442695
        %v399 = vpow.pop %v398
        %v400 = vadd.f32 %v399, 1.0
        %v401 = vrcp.pop %v400
        %v402 = vlaneseq
        %v403 = vshrl.u32 %v402, 7
        %v404 = vsub.s32 0, %v403
        %v405 = vrot.slane %v401, %v404
        %407 = vbcast.lane.b32.xlu0 %v405, 256
        %v408 = vpop.permute.xlu0 %407
        %s410 = sor.u32 256, 8
        %411 = vbcast.lane.b32.xlu0 %v405, %s410
        %v412 = vpop.permute.xlu0 %411
        %s414 = sor.u32 256, 16
        %415 = vbcast.lane.b32.xlu0 %v405, %s414
        %v416 = vpop.permute.xlu0 %415
        %s418 = sor.u32 256, 24
        %419 = vbcast.lane.b32.xlu0 %v405, %s418
        %v420 = vpop.permute.xlu0 %419
        %v421 = vmul.f32 %v189, %v408
        %v422 = vmul.f32 %v190, %v408
        %v423 = vmul.f32 %v191, %v412
        %v424 = vmul.f32 %v192, %v412
        %v425 = vmul.f32 %v193, %v416
        %v426 = vmul.f32 %v194, %v416
        %v427 = vmul.f32 %v195, %v420
        %v428 = vmul.f32 %v196, %v420
        %429 = vst [vmem:[%s188] sm:$0xff] %v421
        %430 = vst [vmem:[%s188 + $0x8] sm:$0xff] %v422
        %431 = vst [vmem:[%s188 + $0x10] sm:$0xff] %v423
        %432 = vst [vmem:[%s188 + $0x18] sm:$0xff] %v424
        %433 = vst [vmem:[%s188 + $0x20] sm:$0xff] %v425
        %434 = vst [vmem:[%s188 + $0x28] sm:$0xff] %v426
        %435 = vst [vmem:[%s188 + $0x30] sm:$0xff] %v427
        %436 = vst [vmem:[%s188 + $0x38] sm:$0xff] %v428
        %s437 = sand.u32 %s96, 1
        %s438 = scalar_lea.sflag [#allocation4], %s437
        %s439 = sand.u32 %s96, 1
        %s440 = smul.addr %s439, 64
        %s441 = scalar_lea.vmem [#allocation5], %s440
        // Predicated region
        $region37: #{tpu_custom_call.1} parent=31 // pred_check
          %p442 = pneg %p106
        $region38: #{tpu_custom_call.1} parent=31 // pred_check_branch
          %444 = sbr.rel (%p442) target = $region40
        $region39: #{tpu_custom_call.1} parent=31 // pred_region
          %s446 = ssub.s32 1024, 1024
          %447 = vsyncadd %s438, %s446
          %s448 = smul.addr %s20, 8
          %s449 = smul.addr %s448, 128
          %s450 = scalar_lea.hbm %s3, %s449
          %s451 = sshll.u32 %s441, 4
          %s452 = int_to_ptr.vmem [resolvable:$true] %s451
          %457 = dma.vmem_to_hbm [thread:$0]  %s452, 1024, %s450, %s438, 256, 256, 16
        $region40: #{tpu_custom_call.1} parent=31 // pred_fallthru
          _
      $region32: #{tpu_custom_call.1} parent=5 // pred_fallthru
        _
      %p458 = scmp.le.s32.totalorder 2, %s15
      // Predicated region
      $region41: #{tpu_custom_call.1} parent=5 // pred_check
        %p459 = pneg %p458
      $region42: #{tpu_custom_call.1} parent=5 // pred_check_branch
        %461 = sbr.rel (%p459) target = $region44
      $region43: #{tpu_custom_call.1} parent=5 // pred_region
        %s462 = ssub.s32 %s15, 2
        // Predicated region
        $region45: #{tpu_custom_call.1} parent=43 // pred_check
          %p463 = pneg %p112
        $region46: #{tpu_custom_call.1} parent=43 // pred_check_branch
          %465 = sbr.rel (%p463) target = $region48
        $region47: #{tpu_custom_call.1} parent=43 // pred_region
          %s466 = sand.u32 %s97, 1
          %s467 = scalar_lea.sflag [#allocation4], %s466
          %s468 = sand.u32 %s97, 1
          %s469 = smul.addr %s468, 64
          %s470 = scalar_lea.vmem [#allocation5], %s469
          %471 = dma.done %s467, 1024
        $region48: #{tpu_custom_call.1} parent=43 // pred_fallthru
          _
      $region44: #{tpu_custom_call.1} parent=5 // pred_fallthru
        _
    $region6: #{tpu_custom_call.1} parent=1 // loop_footer
      %s19 = sadd.s32 1, %s15
    $region7: #{tpu_custom_call.1} parent=1 // loop_footer_branch
      %14 = sbr.rel target = $region3
    $region8: #{tpu_custom_call.1} parent=1 // loop_exit
      _
    %472 = vsyncpa [#allocation3], 1
    %s473 = scalar_lea.sflag [#allocation3], 1
    %474 = vsyncpa %s473, 1
    %475 = vsyncpa [#allocation4], 1
    %s476 = scalar_lea.sflag [#allocation4], 1
    %477 = vsyncpa %s476, 1

</llo_original>
